<compile_context>
chip_gen: v5e
topology: v5e:2x2
jax: 0.10.0
libtpu: 0.0.40
codegen_flags: <defaults>
</compile_context>

<pallas_src>
import functools

import numpy as np
import jax
import jax.numpy as jnp
from jax import lax
from jax.experimental import pallas as pl
from jax.experimental.pallas import tpu as pltpu

KSIZE = 7
PAD = 3

# Scoped-VMEM ceiling we request: below the smallest physical VMEM of any
# supported generation (v7x: 64 MiB / TensorCore), above the 32 MiB defaults.
_VMEM_LIMIT_BYTES = 56 * 2**20
# Per-step working-set budget used when sizing the lane (batch-fold) width.
_VMEM_WORKSET_CAP = 40 * 2**20


@functools.lru_cache(maxsize=None)
def _probe_roll_sign():
    """One-time cached probe pinning the pltpu.roll direction convention.

    Kept (rather than hard-coded) because a wrong sign silently flips the conv
    direction; cost is a single tiny (8,128) kernel traced once per process.
    """

    def k(x_ref, o_ref):
        o_ref[...] = pltpu.roll(x_ref[...], 1, axis=1)

    x = jnp.tile(jnp.arange(128, dtype=jnp.float32)[None, :], (8, 1))
    out = pl.pallas_call(k, out_shape=jax.ShapeDtypeStruct((8, 128), jnp.float32))(x)
    v = int(out[0, 0])
    if v == 127:   # jnp.roll convention: out[i] = x[i - shift]
        return -1
    if v == 1:     # opposite convention: out[i] = x[i + shift]
        return 1
    raise ValueError(f"unexpected pltpu.roll probe value: {v}")


@functools.lru_cache(maxsize=None)
def _vmem_capacity_bytes():
    try:
        return int(pltpu.get_tpu_info().vmem_capacity_bytes)
    except Exception:
        return 64 * 2**20   # conservative fallback: v7x per-TensorCore VMEM


def _pick_batch_block(n, hw, c, ic):
    """How many images to fold into the lane axis per grid step.

    Bigger = fewer grid steps + wider matmuls, but the per-step working set
    ((7C,L) bf16 tap stack, (7C,L) f32 z, (IC,L) f32 p/y, xn/acc, and the
    double-buffered x/out tiles) must stay well inside scoped VMEM -- tighter
    on v7x's 64 MiB.  Also keep >= 2 grid steps whenever the batch allows so
    the "parallel" axis can shard across v7x's two TensorCores and the
    BlockSpec pipeline overlaps the x/out DMAs with compute.
    """
    vmem_cap = _vmem_capacity_bytes()
    per_lane = 82 * c + 16 * ic                       # approx live bytes / lane column
    budget = min(vmem_cap // 2, _VMEM_WORKSET_CAP)
    lane_cap = 2048 if vmem_cap <= 64 * 2**20 else 8192   # v7x vs v6e/v5e
    max_lanes = max(hw, min(lane_cap, budget // per_lane))
    divisors = [d for d in range(1, n + 1) if n % d == 0]
    nb = max([d for d in divisors if d * hw <= max_lanes] or [1])
    while nb > 1 and n // nb < 2:                     # keep >= 2 grid steps
        nb = max(d for d in divisors if d < nb)
    return nb


def convolutional_attention_forward(x, kv, kv3, bn_scale, bn_bias, num_heads,
                                    batch_block=None):
    """Pallas TPU forward of ConvolutionalAttention.

    x        : (N, C, H, W) float32 (NCHW, as in PyTorch)
    kv       : (IC, C, 7, 1) float32   vertical conv weight
    kv3      : (IC, C, 1, 7) float32   horizontal conv weight
    bn_scale : (C,) folded BatchNorm scale (gamma / sqrt(var + eps))
    bn_bias  : (C,) folded BatchNorm bias  (beta - mean * scale)
    """
    N, C, H, W = x.shape
    IC = kv.shape[0]
    HW = H * W
    hd = IC // num_heads
    f32 = jnp.float32
    bf16 = jnp.bfloat16

    NB = _pick_batch_block(N, HW, C, IC) if batch_block is None else batch_block
    assert N % NB == 0, "batch must be divisible by the batch block"
    L = NB * HW
    assert HW % 128 == 0, "pad H*W to a multiple of 128 for lane-dense stores"
    # TODO(synk): for very large H*W also tile the spatial axis (currently one
    # whole image per lane segment).

    roll_sign = _probe_roll_sign()

    # ---------------- host-side glue: prestacked bf16 tap weights ----------------
    kvt = kv[:, :, :, 0].astype(f32)             # (IC, C, 7)
    kv3t = kv3[:, :, 0, :].astype(f32)           # (IC, C, 7)
    # forward conv weight (IC, 7*C): block t = kv[:, :, t]
    w1f = jnp.transpose(kvt, (0, 2, 1)).reshape(IC, KSIZE * C).astype(bf16)
    w3f = jnp.transpose(kv3t, (0, 2, 1)).reshape(IC, KSIZE * C).astype(bf16)
    # transposed conv weight (7*C, IC): block t = kv[:, :, t].T
    w1b = jnp.transpose(kvt, (2, 1, 0)).reshape(KSIZE * C, IC).astype(bf16)
    w3b = jnp.transpose(kv3t, (2, 1, 0)).reshape(KSIZE * C, IC).astype(bf16)

    # block-diagonal head-grouping matrix; 0/1 is exact in bf16, so a single
    # default-precision MXU pass replaces the previous 6-pass f32 HIGHEST matmul
    head_of = np.arange(IC) // hd
    g_mat = jnp.asarray((head_of[:, None] == head_of[None, :]).astype(np.float32)).astype(bf16)

    # tiny (1, L) index rows; boundary masks built in-kernel with compares
    fpos = jnp.asarray(np.tile(np.arange(HW), NB)[None, :].astype(np.float32))
    wpos = jnp.asarray(np.tile(np.arange(HW) % W, NB)[None, :].astype(np.float32))

    shifts_h = [(t - PAD) * W for t in range(KSIZE)]   # vertical conv: whole rows
    shifts_w = [t - PAD for t in range(KSIZE)]         # horizontal conv: within rows

    scale2 = bn_scale.reshape(C, 1).astype(f32)
    bias2 = bn_bias.reshape(C, 1).astype(f32)

    # (N, C, H, W) -> (C, N*HW): channels on sublanes, batch*spatial on lanes
    x_flat = jnp.transpose(x.reshape(N, C, HW), (1, 0, 2)).reshape(C, N * HW).astype(f32)

    # ------------------------------ Pallas kernel --------------------------------
    def kernel(scale_ref, bias_ref, w1f_ref, w1b_ref, w3f_ref, w3b_ref,
               g_ref, fpos_ref, wpos_ref, x_ref, o_ref, p_ref):
        xn = x_ref[...] * scale_ref[...] + bias_ref[...]     # (C, L) f32, eval-mode BN
        fp = fpos_ref[...]                                   # (1, L) local h*W + w
        wp = wpos_ref[...]                                   # (1, L) local w

        def shifted(v, s):
            # value at lane f <- source lane f + s (wrap/cross-image killed by masks)
            return v if s == 0 else pltpu.roll(v, (roll_sign * s) % L, axis=1)

        def make_masks(pos, shifts, limit):
            # hoisted (1, L) boundary masks, shared by fwd_conv AND bwd_conv
            masks = []
            for s in shifts:
                if s == 0:
                    masks.append(None)
                else:
                    ps = pos + float(s)
                    masks.append(jnp.logical_and(ps >= 0.0, ps < float(limit)))
            return masks

        def fwd_conv(w_ref, shifts, masks):
            # 7 shifted/masked taps stacked on sublanes -> ONE matmul (K=7*C);
            # each tap is cast to bf16 BEFORE the concat (half the copy bytes).
            parts = []
            for s, mk in zip(shifts, masks):
                xs = shifted(xn, s)
                if mk is not None:
                    xs = jnp.where(mk, xs, 0.0)
                parts.append(xs.astype(bf16))
            stack = jnp.concatenate(parts, axis=0)                     # (7*C, L) bf16
            return jnp.dot(w_ref[...], stack,
                           preferred_element_type=jnp.float32)         # (IC, L) f32

        def bwd_conv(w_ref, y, shifts, masks):
            # ONE matmul producing all 7 per-tap (C, L) outputs, then roll the
            # (smaller) outputs, mask at the output index, and accumulate.
            z = jnp.dot(w_ref[...], y.astype(bf16),
                        preferred_element_type=jnp.float32)            # (7*C, L) f32
            acc = None
            for t, (s, mk) in enumerate(zip(shifts, masks)):
                zt = shifted(z[t * C:(t + 1) * C, :], s)
                if mk is not None:
                    zt = jnp.where(mk, zt, 0.0)
                acc = zt if acc is None else acc + zt
            return acc                                                 # (C, L) f32

        def act_dn(z):
            # per-image softmax over spatial lanes (per-segment max for
            # stability), then divide by the per-head channel-group sum (+1e-6)
            if NB == 1:
                m = jnp.max(z, axis=1, keepdims=True)
                e = jnp.exp(z - m)
                p = e * pl.reciprocal(jnp.sum(e, axis=1, keepdims=True), approx=True)
            else:
                for i in range(NB):
                    sl = slice(i * HW, (i + 1) * HW)      # 128-aligned lane slice
                    zi = z[:, sl]
                    ei = jnp.exp(zi - jnp.max(zi, axis=1, keepdims=True))
                    inv = pl.reciprocal(jnp.sum(ei, axis=1, keepdims=True), approx=True)
                    p_ref[:, sl] = ei * inv               # unmasked vst into scratch
                p = p_ref[...]
            denom = jnp.dot(g_ref[...], p.astype(bf16),
                            preferred_element_type=jnp.float32) + 1e-6
            return p * pl.reciprocal(denom, approx=True)

        masks_h = make_masks(fp, shifts_h, HW)   # vertical conv: row index bounds
        masks_w = make_masks(wp, shifts_w, W)    # horizontal conv: column bounds

        # branch 1 (7x1 over H), then branch 3 (1x7 over W); single store at end
        y1 = act_dn(fwd_conv(w1f_ref, shifts_h, masks_h))
        out = bwd_conv(w1b_ref, y1, shifts_h, masks_h)
        y3 = act_dn(fwd_conv(w3f_ref, shifts_w, masks_w))
        out = out + bwd_conv(w3b_ref, y3, shifts_w, masks_w)
        o_ref[...] = out

    n_blocks = N // NB
    const = lambda b: (0, 0)

    # advisory cost hint for XLA's scheduler around the custom call
    flops = int(n_blocks * 2 * L * (4 * IC * KSIZE * C + 2 * IC * IC))
    transcendentals = int(n_blocks * 2 * IC * L)
    bytes_accessed = int(8 * C * N * HW + 8 * KSIZE * C * IC + 2 * IC * IC + 8 * L)

    out_flat = pl.pallas_call(
        kernel,
        grid=(n_blocks,),
        in_specs=[
            pl.BlockSpec((C, 1), const),                  # bn scale
            pl.BlockSpec((C, 1), const),                  # bn bias
            pl.BlockSpec((IC, KSIZE * C), const),         # stacked kv   (fwd)
            pl.BlockSpec((KSIZE * C, IC), const),         # stacked kv^T (bwd)
            pl.BlockSpec((IC, KSIZE * C), const),         # stacked kv3  (fwd)
            pl.BlockSpec((KSIZE * C, IC), const),         # stacked kv3^T(bwd)
            pl.BlockSpec((IC, IC), const),                # head-grouping matrix
            pl.BlockSpec((1, L), const),                  # local flat index row
            pl.BlockSpec((1, L), const),                  # local column index row
            pl.BlockSpec((C, L), lambda b: (0, b)),       # x (NB images / step)
        ],
        out_specs=pl.BlockSpec((C, L), lambda b: (0, b)),
        out_shape=jax.ShapeDtypeStruct((C, N * HW), f32),
        scratch_shapes=[pltpu.VMEM((IC, L), jnp.float32)],   # p-buffer (act_dn)
        compiler_params=pltpu.CompilerParams(
            dimension_semantics=("parallel",),
            vmem_limit_bytes=_VMEM_LIMIT_BYTES),
        cost_estimate=pl.CostEstimate(
            flops=flops, transcendentals=transcendentals,
            bytes_accessed=bytes_accessed),
    )(scale2, bias2, w1f, w1b, w3f, w3b, g_mat, fpos, wpos, x_flat)

    return jnp.transpose(out_flat.reshape(C, N, HW), (1, 0, 2)).reshape(N, C, H, W)


# --------------------------- pure-JAX reference (XLA) ---------------------------
def _act_dn_ref(z, num_heads, inter_channels):
    n, c, h, w = z.shape
    hd = inter_channels // num_heads
    zr = z.reshape(n, num_heads, hd, h * w)
    zr = jax.nn.softmax(zr, axis=3)
    zr = zr / (jnp.sum(zr, axis=2, keepdims=True) + 1e-6)
    return zr.reshape(n, inter_channels, h, w)


def reference_forward(x, kv, kv3, bn_scale, bn_bias, num_heads):
    IC = kv.shape[0]
    xn = x * bn_scale.reshape(1, -1, 1, 1) + bn_bias.reshape(1, -1, 1, 1)
    dn = ("NCHW", "OIHW", "NCHW")
    conv = functools.partial(
        lax.conv_general_dilated, window_strides=(1, 1),
        dimension_numbers=dn, precision=lax.Precision.HIGHEST)
    x1 = conv(xn, kv, padding=((PAD, PAD), (0, 0)))
    x1 = _act_dn_ref(x1, num_heads, IC)
    x1 = conv(x1, jnp.transpose(kv, (1, 0, 2, 3)), padding=((PAD, PAD), (0, 0)))
    x3 = conv(xn, kv3, padding=((0, 0), (PAD, PAD)))
    x3 = _act_dn_ref(x3, num_heads, IC)
    x3 = conv(x3, jnp.transpose(kv3, (1, 0, 2, 3)), padding=((0, 0), (PAD, PAD)))
    return x1 + x3


if __name__ == "__main__":
    num_heads = 8
    in_channels = 8
    out_channels = 8        # must be a multiple of num_heads (PyTorch assert)
    inter_channels = 16
    N, H, W = 2, 16, 16

    key = jax.random.PRNGKey(0)
    kx, kk, kk3 = jax.random.split(key, 3)
    x = jax.random.normal(kx, (N, in_channels, H, W), dtype=jnp.float32)

    # trunc_normal_init(std=0.001) equivalents (deterministic, synthetic)
    kv = 0.001 * jax.random.truncated_normal(
        kk, -2.0, 2.0, (inter_channels, in_channels, 7, 1), dtype=jnp.float32)
    kv3 = 0.001 * jax.random.truncated_normal(
        kk3, -2.0, 2.0, (inter_channels, in_channels, 1, 7), dtype=jnp.float32)

    # BatchNorm2d(in_channels, eps=1e-6): weight=1, bias=0, running stats (0, 1),
    # folded into a per-channel affine (inference semantics).
    eps = 1e-6
    gamma = jnp.ones((in_channels,), jnp.float32)
    beta = jnp.zeros((in_channels,), jnp.float32)
    rmean = jnp.zeros((in_channels,), jnp.float32)
    rvar = jnp.ones((in_channels,), jnp.float32)
    bn_scale = gamma / jnp.sqrt(rvar + eps)
    bn_bias = beta - rmean * bn_scale

    out = convolutional_attention_forward(x, kv, kv3, bn_scale, bn_bias, num_heads)
    out = jax.block_until_ready(out)

    ref = reference_forward(x, kv, kv3, bn_scale, bn_bias, num_heads)
    # bf16 MXU operands + approx reciprocals: verify to 2% relative with an
    # absolute floor of 2e-4 (outputs are ~1e-2 scale; expected numerical error
    # of the mixed-precision kernel is well below this).
    np.testing.assert_allclose(np.asarray(out), np.asarray(ref), rtol=2e-2, atol=2e-4)
    print("KERNEL_OK")
</pallas_src>

<mosaic_0001>
module attributes {stable_mosaic.version = 11 : i64} {
  func.func @k(%arg0: memref<8x128xf32, #tpu.memory_space<vmem>>, %arg1: memref<8x128xf32, #tpu.memory_space<vmem>>) attributes {dimension_semantics = [], scalar_prefetch = 0 : i64, scratch_operands = 0 : i64, tpu.core_type = #tpu.core_type<tc>} {
    %c0 = arith.constant 0 : index
    %c0_0 = arith.constant 0 : index
    %0 = vector.load %arg0[%c0, %c0_0] : memref<8x128xf32, #tpu.memory_space<vmem>>, vector<8x128xf32>
    %c1_i32 = arith.constant 1 : i32
    %1 = tpu.dynamic_rotate %0 by %c1_i32 dim 1 : vector<8x128xf32>, i32 -> vector<8x128xf32>
    %c0_1 = arith.constant 0 : index
    %c0_2 = arith.constant 0 : index
    %2 = vector.load %arg1[%c0_1, %c0_2] : memref<8x128xf32, #tpu.memory_space<vmem>>, vector<8x128xf32>
    tpu.vector_store %arg1[%c0_1, %c0_2], %1 {strides = array<i32>} : memref<8x128xf32, #tpu.memory_space<vmem>>, vector<8x128xf32>,
    return
  }
}

</mosaic_0001>

<llo_original>
// kernel: tpu_custom_call.1
$region0: #{tpu_custom_call.1}
  #allocation0 [shape = 'u32[]', space=smem, size = 0x4, offset = 0x4, fixed_abs, tag = 'smem constant byte address 0x4 - core index']
  #allocation1 [shape = 'u32[72,128]{1,0:T(1,128)}', space=vmem, size = 0x9000, scoped, tag = 'internal scratch']
  %s0 = inlined_call_operand.hbm [shape: f32[8,128], index: 0, kind: input, shape index: {}]
  %s1 = inlined_call_operand.hbm [shape: f32[8,128], index: 1, kind: output, shape index: {}]
  %s2 = sld [smem:[#allocation0]]
  $region18: #{tpu_custom_call.1} parent=0
    _
  %s4 = ssub.s32 1, %s2
  %s5 = scalar_select 0, %s4, %s2
  $region1: #{tpu_custom_call.1} parent=0
    #allocation2 [shape = 'u8[4096]{0}', space=vmem, size = 0x1000, scoped, tag = 'input window, operand 0, single buffered']
    #allocation3 [shape = 's32[1]{0}', space=sflag, size = 0x4, scoped, tag = 'scoped memory for tpu_custom_call.1']
    #allocation4 [shape = 's32[1]{0}', space=sflag, size = 0x4, scoped, tag = 'scoped memory for tpu_custom_call.1']
    #allocation5 [shape = 'u8[4096]{0}', space=vmem, size = 0x1000, scoped, tag = 'output window, operand 0, single buffered']
    %6 = vsyncpa [#allocation3], 0
    %7 = vsyncpa [#allocation4], 0
    // Predicated region
    $region2: #{tpu_custom_call.1} parent=1 // pred_check
      _
    $region3: #{tpu_custom_call.1} parent=1 // pred_check_branch
      %9 = sbr.rel (0) target = $region5
    $region4: #{tpu_custom_call.1} parent=1 // pred_region
      %11 = vsyncadd [#allocation3], 0
      %s13 = sshll.u32 %s0, 4
      %s14 = int_to_ptr.hbm [resolvable:$true] %s13
      %s15 = sshll.u32 [#allocation2], 4
      %s16 = int_to_ptr.vmem [resolvable:$true] %s15
      %18 = dma.hbm_to_vmem [thread:$0]  %s14, 128, %s16, [#allocation3]
    $region5: #{tpu_custom_call.1} parent=1 // pred_fallthru
      _
    // Predicated region
    $region6: #{tpu_custom_call.1} parent=1 // pred_check
      _
    $region7: #{tpu_custom_call.1} parent=1 // pred_check_branch
      %20 = sbr.rel (0) target = $region9
    $region8: #{tpu_custom_call.1} parent=1 // pred_region
      %22 = dma.done [#allocation3], 128
    $region9: #{tpu_custom_call.1} parent=1 // pred_fallthru
      _
    %v23 = vld [vmem:[#allocation2] sm:$0xff]
    %24 = vrot.lane.b32.xlu0 %v23, 1
    %v25 = vpop.permute.xlu0 %24
    %26 = vst [vmem:[#allocation5] sm:$0xff] %v25
    // Predicated region
    $region10: #{tpu_custom_call.1} parent=1 // pred_check
      _
    $region11: #{tpu_custom_call.1} parent=1 // pred_check_branch
      %28 = sbr.rel (0) target = $region13
    $region12: #{tpu_custom_call.1} parent=1 // pred_region
      %30 = vsyncadd [#allocation4], 0
      %s32 = sshll.u32 [#allocation5], 4
      %s33 = int_to_ptr.vmem [resolvable:$true] %s32
      %s34 = sshll.u32 %s1, 4
      %s35 = int_to_ptr.hbm [resolvable:$true] %s34
      %37 = dma.vmem_to_hbm [thread:$0]  %s33, 128, %s35, [#allocation4]
    $region13: #{tpu_custom_call.1} parent=1 // pred_fallthru
      _
    // Predicated region
    $region14: #{tpu_custom_call.1} parent=1 // pred_check
      _
    $region15: #{tpu_custom_call.1} parent=1 // pred_check_branch
      %39 = sbr.rel (0) target = $region17
    $region16: #{tpu_custom_call.1} parent=1 // pred_region
      %41 = dma.done [#allocation4], 128
    $region17: #{tpu_custom_call.1} parent=1 // pred_fallthru
      _
    %42 = vsyncpa [#allocation3], 1
    %43 = vsyncpa [#allocation4], 1

</llo_original>
